<compile_context>
chip_gen: v7x
topology: tpu7x:2x2x1
jax: 0.10.0
libtpu: 0.0.40
codegen_flags: <defaults>
</compile_context>

<pallas_src>
import jax
import jax.numpy as jnp
from jax.experimental import pallas as pl
from jax.experimental.pallas import tpu as pltpu

BN_EPS = 1e-5
LANE = 128
NEG_BIG = -1e30          # bias for padded softmax classes -> exp() == 0
TILE_CAP = 1024          # sweep 1024-2048; VMEM footprint ~5-10 MiB everywhere


def _round_up(x, m):
    return (x + m - 1) // m * m


# ------------------------------------------------------------------ kernel --

def entity_embed_kernel(gidx_ref, m_ref, c2_ref, w3_ref, c3_ref, w4_ref,
                        c4_ref, o_ref):
    tb, n_cols = gidx_ref.shape
    c_pad = m_ref.shape[0]

    # Multi-hot encoding of the (globally offset) categorical indices: one 1
    # per column.  Replaces embedding gather + concat; bn1 + fc2 are already
    # folded into m_ref, so a single MXU pass does lookup+concat+bn1+fc2.
    gidx = gidx_ref[...]                                        # (TB, n_cols) i32
    iota = jax.lax.broadcasted_iota(jnp.int32, (tb, c_pad), 1)
    multi_hot = jnp.zeros((tb, c_pad), jnp.float32)
    for c in range(n_cols):                                     # tiny static unroll
        multi_hot += jnp.where(gidx[:, c:c + 1] == iota, 1.0, 0.0)

    h = jnp.dot(multi_hot.astype(jnp.bfloat16), m_ref[...],
                preferred_element_type=jnp.float32) + c2_ref[...]
    h = jnp.maximum(h, 0.0)                                     # relu(fc2)
    h = jnp.dot(h.astype(jnp.bfloat16), w3_ref[...],
                preferred_element_type=jnp.float32) + c3_ref[...]
    h = jnp.maximum(h, 0.0)                                     # relu(fc3)
    logits = jnp.dot(h.astype(jnp.bfloat16), w4_ref[...],
                     preferred_element_type=jnp.float32) + c4_ref[...]

    # Softmax over the 128-lane padded class dim; padded classes carry a
    # -1e30 f32 bias so they contribute exp(...) == 0 to the denominator.
    logits = logits - jnp.max(logits, axis=-1, keepdims=True)
    e = jnp.exp(logits)
    inv = pl.reciprocal(jnp.sum(e, axis=-1, keepdims=True), approx=True)
    o_ref[...] = (e * inv).astype(o_ref.dtype)


# ----------------------------------------------------------------- wrapper --

def fold_bn_into_linear(g, b, m, v, w, c):
    """y = ((x - m)*s + b) @ w + c  with s = g/sqrt(v+eps)
         = x @ (s^T * w) + ((b - m*s) @ w + c)."""
    s = g * jax.lax.rsqrt(v + BN_EPS)          # (1, din)
    w_f = w * s.reshape(-1, 1)                 # (din, dout)
    c_f = c + (b - m * s) @ w                  # (1, dout)
    return w_f, c_f


def prepare_params(tables, params):
    """Fold eval-mode BN into the adjacent Linears, fold the embedding tables
    into the (bn1-folded) fc2 weight, pad to lane-aligned shapes, cast the
    matmul operands to bf16 (MXU-native on v5e/v6e/v7x)."""
    w2, c2 = fold_bn_into_linear(params["g1"], params["b1"], params["m1"],
                                 params["v1"], params["w2"], params["c2"])
    w3, c3 = fold_bn_into_linear(params["g2"], params["b2"], params["m2"],
                                 params["v2"], params["w3"], params["c3"])
    w4, c4 = fold_bn_into_linear(params["g3"], params["b3"], params["m3"],
                                 params["v3"], params["w4"], params["c4"])

    # x_embed @ w2 = sum_c table_c[idx_c] @ w2[rows_c] = multihot @ M_all
    dims = [t.shape[1] for t in tables]
    cards = [t.shape[0] for t in tables]
    offs_e = [0]
    for d in dims[:-1]:
        offs_e.append(offs_e[-1] + d)
    m_all = jnp.concatenate(
        [t @ w2[o:o + d] for t, o, d in zip(tables, offs_e, dims)], axis=0)

    col_offsets = [0]
    for n in cards[:-1]:
        col_offsets.append(col_offsets[-1] + n)

    C, H = m_all.shape
    C_pad = _round_up(C, LANE)
    # H_pad=384 is optimal on v5e (128-wide MXU); sweep 512 on v6e/v7x only if
    # profiling shows the MXU pass (not DMA / step overhead) is binding.
    H_pad = _round_up(H, LANE)
    O_pad = LANE

    def pad2(a, rows, cols, fill=0.0):
        return jnp.pad(a, ((0, rows - a.shape[0]), (0, cols - a.shape[1])),
                       constant_values=fill)

    return dict(
        m=pad2(m_all, C_pad, H_pad).astype(jnp.bfloat16),
        c2=pad2(c2, 1, H_pad).astype(jnp.float32),
        w3=pad2(w3, H_pad, H_pad).astype(jnp.bfloat16),
        c3=pad2(c3, 1, H_pad).astype(jnp.float32),
        w4=pad2(w4, H_pad, O_pad).astype(jnp.bfloat16),
        c4=pad2(c4, 1, O_pad, fill=NEG_BIG).astype(jnp.float32),
        col_offsets=tuple(col_offsets),
    )


def _pick_tile(B):
    # >=2 tiles whenever possible so both v7x TensorCores get work; tile size
    # derived from B (not a fixed cap) so round-up padding waste stays small.
    n_tiles = max(2, pl.cdiv(B, TILE_CAP))
    tile_b = max(16, _round_up(pl.cdiv(B, n_tiles), 16))   # 16: bf16 sublane pack
    grid_n = pl.cdiv(B, tile_b)
    return tile_b, grid_n


def entity_embed_forward(idx_cols, prep, n_classes=2):
    """idx_cols: list of (B,) int32 index vectors, one per categorical column."""
    gidx = jnp.stack([idx.astype(jnp.int32) + off
                      for idx, off in zip(idx_cols, prep["col_offsets"])],
                     axis=1)                               # (B, n_cols)
    B, n_cols = gidx.shape
    C_pad, H_pad = prep["m"].shape
    O_pad = prep["w4"].shape[1]

    tile_b, grid_n = _pick_tile(B)
    B_pad = tile_b * grid_n
    gidx = jnp.pad(gidx, ((0, B_pad - B), (0, 0)))         # garbage rows, sliced off

    def row_spec(shape):
        return pl.BlockSpec(shape, lambda i: (i, 0))

    def fixed_spec(shape):
        return pl.BlockSpec(shape, lambda i: (0, 0))

    out = pl.pallas_call(
        entity_embed_kernel,
        out_shape=jax.ShapeDtypeStruct((B_pad, O_pad), jnp.bfloat16),
        grid=(grid_n,),
        in_specs=[
            row_spec((tile_b, n_cols)),        # int32 indices (12 B/row HBM read)
            fixed_spec((C_pad, H_pad)),        # folded embed+bn1+fc2 (resident)
            fixed_spec((1, H_pad)),            # c2
            fixed_spec((H_pad, H_pad)),        # w3 (bn2 folded)
            fixed_spec((1, H_pad)),            # c3
            fixed_spec((H_pad, O_pad)),        # w4 (bn3 folded)
            fixed_spec((1, O_pad)),            # c4 (-1e30 on padded classes)
        ],
        out_specs=row_spec((tile_b, O_pad)),   # lane-dense bf16 output slab
        compiler_params=pltpu.CompilerParams(
            dimension_semantics=("parallel",)),  # 2-TC batch sharding on v7x
    )(gidx, prep["m"], prep["c2"], prep["w3"], prep["c3"], prep["w4"],
      prep["c4"])

    return out[:B, :n_classes].astype(jnp.float32)


# ------------------------------------------------------- init / references --

def kaiming_normal(key, fan_in, fan_out):
    # nn.init.kaiming_normal_ on a (out, in) weight -> std = sqrt(2/fan_in);
    # stored transposed as (in, out) so the forward computes x @ W + b.
    std = (2.0 / fan_in) ** 0.5
    return jax.random.normal(key, (fan_in, fan_out), jnp.float32) * std


def linear_bias(key, fan_in, fan_out):
    bound = 1.0 / (fan_in ** 0.5)
    return jax.random.uniform(key, (1, fan_out), jnp.float32, -bound, bound)


def init_entity_embed(key, cardinalities):
    embed_dims = [min((n + 1) // 2, 50) for n in cardinalities]
    E = sum(embed_dims)
    H = 300
    keys = jax.random.split(key, 24)

    # embedding tables (nn.Embedding default init: N(0, 1))
    tables = [jax.random.normal(keys[i], (n, d), jnp.float32)
              for i, (n, d) in enumerate(zip(cardinalities, embed_dims))]

    def bn_params(dim, k):
        # non-trivial "trained" running stats so the BN fold is exercised
        k1, k2, k3, k4 = jax.random.split(k, 4)
        g = jax.random.uniform(k1, (1, dim), jnp.float32, 0.5, 1.5)
        b = 0.1 * jax.random.normal(k2, (1, dim), jnp.float32)
        m = 0.5 * jax.random.normal(k3, (1, dim), jnp.float32)
        v = jax.random.uniform(k4, (1, dim), jnp.float32, 0.5, 1.5)
        return g, b, m, v

    g1, b1, m1, v1 = bn_params(E, keys[8])
    g2, b2, m2, v2 = bn_params(H, keys[9])
    g3, b3, m3, v3 = bn_params(H, keys[10])

    params = dict(
        g1=g1, b1=b1, m1=m1, v1=v1,
        w2=kaiming_normal(keys[11], E, H), c2=linear_bias(keys[12], E, H),
        g2=g2, b2=b2, m2=m2, v2=v2,
        w3=kaiming_normal(keys[13], H, H), c3=linear_bias(keys[14], H, H),
        g3=g3, b3=b3, m3=m3, v3=v3,
        w4=kaiming_normal(keys[15], H, 2), c4=linear_bias(keys[16], H, 2),
    )
    return tables, params, embed_dims


def reference_forward_f32(tables, params, idx_cols):
    """Exact original module math in f32 (unfused embed/BN/softmax)."""
    x = jnp.concatenate([t[i] for t, i in zip(tables, idx_cols)], axis=1)

    def bn(h, g, b, m, v):
        return (h - m) * (g / jnp.sqrt(v + BN_EPS)) + b

    p = params
    h = bn(x, p["g1"], p["b1"], p["m1"], p["v1"])
    h = jnp.maximum(h @ p["w2"] + p["c2"], 0.0)
    h = bn(h, p["g2"], p["b2"], p["m2"], p["v2"])
    h = jnp.maximum(h @ p["w3"] + p["c3"], 0.0)
    h = bn(h, p["g3"], p["b3"], p["m3"], p["v3"])
    return jax.nn.softmax(h @ p["w4"] + p["c4"], axis=1)


def reference_forward_matched(prep, idx_cols, n_classes=2):
    """Same folded / padded / bf16 math as the kernel, in plain JAX."""
    gidx = jnp.stack([idx.astype(jnp.int32) + off
                      for idx, off in zip(idx_cols, prep["col_offsets"])],
                     axis=1)
    C_pad = prep["m"].shape[0]
    one = gidx[:, :, None] == jnp.arange(C_pad, dtype=jnp.int32)[None, None, :]
    multi_hot = one.astype(jnp.float32).sum(axis=1)
    h = jnp.maximum(jnp.dot(multi_hot.astype(jnp.bfloat16), prep["m"],
                            preferred_element_type=jnp.float32) + prep["c2"], 0.0)
    h = jnp.maximum(jnp.dot(h.astype(jnp.bfloat16), prep["w3"],
                            preferred_element_type=jnp.float32) + prep["c3"], 0.0)
    logits = jnp.dot(h.astype(jnp.bfloat16), prep["w4"],
                     preferred_element_type=jnp.float32) + prep["c4"]
    p = jax.nn.softmax(logits, axis=-1)[:, :n_classes]
    return p.astype(jnp.bfloat16).astype(jnp.float32)


# -------------------------------------------------------------------- main --

if __name__ == "__main__":
    key = jax.random.PRNGKey(0)
    k_param, k_idx = jax.random.split(key)

    B = 8
    cardinalities = [7, 11, 23]          # 3 categorical columns
    tables, params, embed_dims = init_entity_embed(k_param, cardinalities)

    idx_keys = jax.random.split(k_idx, len(cardinalities))
    idx_cols = [jax.random.randint(kk, (B,), 0, n, jnp.int32)
                for kk, n in zip(idx_keys, cardinalities)]

    prep = prepare_params(tables, params)          # BN + embedding fold, pad, bf16
    out = entity_embed_forward(idx_cols, prep)     # (8, 2) softmax probabilities
    out = jax.block_until_ready(out)

    assert out.shape == (B, 2)
    # bf16 output + approx reciprocal: rows sum to 1 within ~1e-2.
    assert bool(jnp.all(jnp.abs(jnp.sum(out, axis=1) - 1.0) < 1e-2))

    ref_match = reference_forward_matched(prep, idx_cols)     # same precision path
    ref_exact = reference_forward_f32(tables, params, idx_cols)  # original f32 math
    assert bool(jnp.allclose(out, ref_match, atol=1e-2, rtol=0.0))
    assert bool(jnp.allclose(out, ref_exact, atol=5e-2, rtol=0.0))

    print("KERNEL_OK")
</pallas_src>

<mosaic_0001>
module attributes {stable_mosaic.version = 11 : i64} {
  func.func @entity_embed_kernel(%arg0: i32, %arg1: memref<16x3xi32, #tpu.memory_space<vmem>>, %arg2: memref<128x384xbf16, #tpu.memory_space<vmem>>, %arg3: memref<1x384xf32, #tpu.memory_space<vmem>>, %arg4: memref<384x384xbf16, #tpu.memory_space<vmem>>, %arg5: memref<1x384xf32, #tpu.memory_space<vmem>>, %arg6: memref<384x128xbf16, #tpu.memory_space<vmem>>, %arg7: memref<1x128xf32, #tpu.memory_space<vmem>>, %arg8: memref<16x128xbf16, #tpu.memory_space<vmem>>) attributes {dimension_semantics = [#tpu.dimension_semantics<parallel>], iteration_bounds = array<i64: 1>, scalar_prefetch = 0 : i64, scratch_operands = 0 : i64, tpu.core_type = #tpu.core_type<tc>, window_params = [{transform_indices = @transform_0, window_bounds = array<i64: 16, 3>}, {pipeline_mode = #tpu.pipeline_mode<synchronous>, transform_indices = @transform_1, window_bounds = array<i64: 128, 384>}, {pipeline_mode = #tpu.pipeline_mode<synchronous>, transform_indices = @transform_2, window_bounds = array<i64: 1, 384>}, {pipeline_mode = #tpu.pipeline_mode<synchronous>, transform_indices = @transform_3, window_bounds = array<i64: 384, 384>}, {pipeline_mode = #tpu.pipeline_mode<synchronous>, transform_indices = @transform_4, window_bounds = array<i64: 1, 384>}, {pipeline_mode = #tpu.pipeline_mode<synchronous>, transform_indices = @transform_5, window_bounds = array<i64: 384, 128>}, {pipeline_mode = #tpu.pipeline_mode<synchronous>, transform_indices = @transform_6, window_bounds = array<i64: 1, 128>}, {transform_indices = @transform_7, window_bounds = array<i64: 16, 128>}]} {
    %c0 = arith.constant 0 : index
    %c0_0 = arith.constant 0 : index
    %0 = vector.load %arg1[%c0, %c0_0] : memref<16x3xi32, #tpu.memory_space<vmem>>, vector<16x3xi32>
    %1 = tpu.iota {dimensions = array<i32: 1>} : vector<16x128xi32>
    %cst = arith.constant 0.000000e+00 : f32
    %2 = vector.broadcast %cst : f32 to vector<16x128xf32>
    %3 = vector.extract_strided_slice %0 {offsets = [0, 0], sizes = [16, 1], strides = [1, 1]} : vector<16x3xi32> to vector<16x1xi32>
    %4 = vector.broadcast %3 : vector<16x1xi32> to vector<16x128xi32>
    %5 = arith.cmpi eq, %4, %1 : vector<16x128xi32>
    %cst_1 = arith.constant 1.000000e+00 : f32
    %cst_2 = arith.constant 0.000000e+00 : f32
    %6 = vector.broadcast %cst_1 : f32 to vector<16x128xf32>
    %7 = vector.broadcast %cst_2 : f32 to vector<16x128xf32>
    %8 = arith.select %5, %6, %7 : vector<16x128xi1>, vector<16x128xf32>
    %9 = arith.addf %2, %8 : vector<16x128xf32>
    %10 = vector.extract_strided_slice %0 {offsets = [0, 1], sizes = [16, 1], strides = [1, 1]} : vector<16x3xi32> to vector<16x1xi32>
    %11 = vector.broadcast %10 : vector<16x1xi32> to vector<16x128xi32>
    %12 = arith.cmpi eq, %11, %1 : vector<16x128xi32>
    %cst_3 = arith.constant 1.000000e+00 : f32
    %cst_4 = arith.constant 0.000000e+00 : f32
    %13 = vector.broadcast %cst_3 : f32 to vector<16x128xf32>
    %14 = vector.broadcast %cst_4 : f32 to vector<16x128xf32>
    %15 = arith.select %12, %13, %14 : vector<16x128xi1>, vector<16x128xf32>
    %16 = arith.addf %9, %15 : vector<16x128xf32>
    %17 = vector.extract_strided_slice %0 {offsets = [0, 2], sizes = [16, 1], strides = [1, 1]} : vector<16x3xi32> to vector<16x1xi32>
    %18 = vector.broadcast %17 : vector<16x1xi32> to vector<16x128xi32>
    %19 = arith.cmpi eq, %18, %1 : vector<16x128xi32>
    %cst_5 = arith.constant 1.000000e+00 : f32
    %cst_6 = arith.constant 0.000000e+00 : f32
    %20 = vector.broadcast %cst_5 : f32 to vector<16x128xf32>
    %21 = vector.broadcast %cst_6 : f32 to vector<16x128xf32>
    %22 = arith.select %19, %20, %21 : vector<16x128xi1>, vector<16x128xf32>
    %23 = arith.addf %16, %22 : vector<16x128xf32>
    %24 = arith.truncf %23 : vector<16x128xf32> to vector<16x128xbf16>
    %c0_7 = arith.constant 0 : index
    %c0_8 = arith.constant 0 : index
    %25 = vector.load %arg2[%c0_7, %c0_8] : memref<128x384xbf16, #tpu.memory_space<vmem>>, vector<128x384xbf16>
    %cst_9 = arith.constant dense<0.000000e+00> : vector<16x384xf32>
    %26 = tpu.matmul %24, %25, %cst_9 {dimension_numbers = #tpu.dot_dimension_numbers<[1], [0], [0], [1], [0, 0, 1, 1], [], []>} : vector<16x128xbf16>, vector<128x384xbf16>, vector<16x384xf32> -> vector<16x384xf32>
    %c0_10 = arith.constant 0 : index
    %c0_11 = arith.constant 0 : index
    %27 = vector.load %arg3[%c0_10, %c0_11] : memref<1x384xf32, #tpu.memory_space<vmem>>, vector<1x384xf32>
    %28 = vector.broadcast %27 : vector<1x384xf32> to vector<16x384xf32>
    %29 = arith.addf %26, %28 : vector<16x384xf32>
    %cst_12 = arith.constant 0.000000e+00 : f32
    %30 = vector.broadcast %cst_12 : f32 to vector<16x384xf32>
    %31 = arith.maximumf %29, %30 : vector<16x384xf32>
    %32 = arith.truncf %31 : vector<16x384xf32> to vector<16x384xbf16>
    %c0_13 = arith.constant 0 : index
    %c0_14 = arith.constant 0 : index
    %33 = vector.load %arg4[%c0_13, %c0_14] : memref<384x384xbf16, #tpu.memory_space<vmem>>, vector<384x384xbf16>
    %cst_15 = arith.constant dense<0.000000e+00> : vector<16x384xf32>
    %34 = tpu.matmul %32, %33, %cst_15 {dimension_numbers = #tpu.dot_dimension_numbers<[1], [0], [0], [1], [0, 0, 1, 1], [], []>} : vector<16x384xbf16>, vector<384x384xbf16>, vector<16x384xf32> -> vector<16x384xf32>
    %c0_16 = arith.constant 0 : index
    %c0_17 = arith.constant 0 : index
    %35 = vector.load %arg5[%c0_16, %c0_17] : memref<1x384xf32, #tpu.memory_space<vmem>>, vector<1x384xf32>
    %36 = vector.broadcast %35 : vector<1x384xf32> to vector<16x384xf32>
    %37 = arith.addf %34, %36 : vector<16x384xf32>
    %cst_18 = arith.constant 0.000000e+00 : f32
    %38 = vector.broadcast %cst_18 : f32 to vector<16x384xf32>
    %39 = arith.maximumf %37, %38 : vector<16x384xf32>
    %40 = arith.truncf %39 : vector<16x384xf32> to vector<16x384xbf16>
    %c0_19 = arith.constant 0 : index
    %c0_20 = arith.constant 0 : index
    %41 = vector.load %arg6[%c0_19, %c0_20] : memref<384x128xbf16, #tpu.memory_space<vmem>>, vector<384x128xbf16>
    %cst_21 = arith.constant dense<0.000000e+00> : vector<16x128xf32>
    %42 = tpu.matmul %40, %41, %cst_21 {dimension_numbers = #tpu.dot_dimension_numbers<[1], [0], [0], [1], [0, 0, 1, 1], [], []>} : vector<16x384xbf16>, vector<384x128xbf16>, vector<16x128xf32> -> vector<16x128xf32>
    %c0_22 = arith.constant 0 : index
    %c0_23 = arith.constant 0 : index
    %43 = vector.load %arg7[%c0_22, %c0_23] : memref<1x128xf32, #tpu.memory_space<vmem>>, vector<1x128xf32>
    %44 = vector.broadcast %43 : vector<1x128xf32> to vector<16x128xf32>
    %45 = arith.addf %42, %44 : vector<16x128xf32>
    %cst_24 = arith.constant dense<0xFF800000> : vector<16xf32>
    %46 = vector.multi_reduction <maximumf>, %45, %cst_24 [1] : vector<16x128xf32> to vector<16xf32>
    %47 = vector.shape_cast %46 : vector<16xf32> to vector<16x1xf32>
    %48 = vector.broadcast %47 : vector<16x1xf32> to vector<16x128xf32>
    %49 = arith.subf %45, %48 : vector<16x128xf32>
    %50 = math.exp %49 : vector<16x128xf32>
    %cst_25 = arith.constant dense<0.000000e+00> : vector<16xf32>
    %51 = vector.multi_reduction <add>, %50, %cst_25 [1] : vector<16x128xf32> to vector<16xf32>
    %52 = vector.shape_cast %51 : vector<16xf32> to vector<16x1xf32>
    %53 = tpu.reciprocal %52 {approx = true} : vector<16x1xf32> -> vector<16x1xf32>
    %54 = vector.broadcast %53 : vector<16x1xf32> to vector<16x128xf32>
    %55 = arith.mulf %50, %54 : vector<16x128xf32>
    %56 = arith.truncf %55 : vector<16x128xf32> to vector<16x128xbf16>
    %c0_26 = arith.constant 0 : index
    %c0_27 = arith.constant 0 : index
    %57 = vector.load %arg8[%c0_26, %c0_27] : memref<16x128xbf16, #tpu.memory_space<vmem>>, vector<16x128xbf16>
    tpu.vector_store %arg8[%c0_26, %c0_27], %56 {strides = array<i32>} : memref<16x128xbf16, #tpu.memory_space<vmem>>, vector<16x128xbf16>,
    return
  }
  func.func @transform_0(%arg0: i32) -> (i32, i32) {
    %c0_i32 = arith.constant 0 : i32
    %c0_i32_0 = arith.constant 0 : i32
    return %arg0, %c0_i32 : i32, i32
  }
  func.func @transform_1(%arg0: i32) -> (i32, i32) {
    %c0_i32 = arith.constant 0 : i32
    %c0_i32_0 = arith.constant 0 : i32
    %c0_i32_1 = arith.constant 0 : i32
    return %c0_i32, %c0_i32_0 : i32, i32
  }
  func.func @transform_2(%arg0: i32) -> (i32, i32) {
    %c0_i32 = arith.constant 0 : i32
    %c0_i32_0 = arith.constant 0 : i32
    %c0_i32_1 = arith.constant 0 : i32
    return %c0_i32, %c0_i32_0 : i32, i32
  }
  func.func @transform_3(%arg0: i32) -> (i32, i32) {
    %c0_i32 = arith.constant 0 : i32
    %c0_i32_0 = arith.constant 0 : i32
    %c0_i32_1 = arith.constant 0 : i32
    return %c0_i32, %c0_i32_0 : i32, i32
  }
  func.func @transform_4(%arg0: i32) -> (i32, i32) {
    %c0_i32 = arith.constant 0 : i32
    %c0_i32_0 = arith.constant 0 : i32
    %c0_i32_1 = arith.constant 0 : i32
    return %c0_i32, %c0_i32_0 : i32, i32
  }
  func.func @transform_5(%arg0: i32) -> (i32, i32) {
    %c0_i32 = arith.constant 0 : i32
    %c0_i32_0 = arith.constant 0 : i32
    %c0_i32_1 = arith.constant 0 : i32
    return %c0_i32, %c0_i32_0 : i32, i32
  }
  func.func @transform_6(%arg0: i32) -> (i32, i32) {
    %c0_i32 = arith.constant 0 : i32
    %c0_i32_0 = arith.constant 0 : i32
    %c0_i32_1 = arith.constant 0 : i32
    return %c0_i32, %c0_i32_0 : i32, i32
  }
  func.func @transform_7(%arg0: i32) -> (i32, i32) {
    %c0_i32 = arith.constant 0 : i32
    %c0_i32_0 = arith.constant 0 : i32
    return %arg0, %c0_i32 : i32, i32
  }
}

</mosaic_0001>

<llo_original>
// kernel: tpu_custom_call.1
$region0: #{tpu_custom_call.1}
  #allocation0 [shape = 'u32[]', space=smem, size = 0x4, offset = 0x4, fixed_abs, tag = 'smem constant byte address 0x4 - core index']
  #allocation1 [shape = 'u32[144,128]{1,0:T(1,128)}', space=vmem, size = 0x12000, scoped, tag = 'internal scratch']
  %s0 = inlined_call_operand.vmem [shape: s32[16,3], index: 0, kind: input, shape index: {}]
  %s1 = inlined_call_operand.hbm [shape: bf16[128,384], index: 1, kind: input, shape index: {}]
  %s2 = inlined_call_operand.vmem [shape: f32[1,384], index: 2, kind: input, shape index: {}]
  %s3 = inlined_call_operand.hbm [shape: bf16[384,384], index: 3, kind: input, shape index: {}]
  %s4 = inlined_call_operand.vmem [shape: f32[1,384], index: 4, kind: input, shape index: {}]
  %s5 = inlined_call_operand.hbm [shape: bf16[384,128], index: 5, kind: input, shape index: {}]
  %s6 = inlined_call_operand.vmem [shape: f32[1,128], index: 6, kind: input, shape index: {}]
  %s7 = inlined_call_operand.hbm [shape: bf16[16,128], index: 7, kind: output, shape index: {}]
  %s8 = sld [smem:[#allocation0]]
  $region50: #{tpu_custom_call.1} parent=0
    _
  %s10 = ssub.s32 1, %s8
  %s11 = scalar_select 0, %s10, %s8
  $region1: #{tpu_custom_call.1} parent=0
    #allocation2 [shape = 'u8[98304]{0}', space=vmem, size = 0x18000, scoped, tag = 'input window, operand 1, single buffered']
    #allocation3 [shape = 's32[1]{0}', space=sflag, size = 0x4, scoped, tag = 'scoped memory for tpu_custom_call.1']
    #allocation4 [shape = 's32[1]{0}', space=sflag, size = 0x4, scoped, tag = 'scoped memory for tpu_custom_call.1']
    #allocation5 [shape = 'u8[294912]{0}', space=vmem, size = 0x48000, scoped, tag = 'input window, operand 3, single buffered']
    #allocation6 [shape = 's32[1]{0}', space=sflag, size = 0x4, scoped, tag = 'scoped memory for tpu_custom_call.1']
    #allocation7 [shape = 'u8[98304]{0}', space=vmem, size = 0x18000, scoped, tag = 'input window, operand 5, single buffered']
    #allocation8 [shape = 'u8[4096]{0}', space=vmem, size = 0x1000, scoped, tag = 'output window, operand 0, single buffered']
    %12 = vsyncpa [#allocation3], 0
    %13 = vsyncpa [#allocation6], 0
    %14 = vsyncpa [#allocation4], 0
    // Predicated region
    $region2: #{tpu_custom_call.1} parent=1 // pred_check
      _
    $region3: #{tpu_custom_call.1} parent=1 // pred_check_branch
      %16 = sbr.rel (0) target = $region5
    $region4: #{tpu_custom_call.1} parent=1 // pred_region
      _
    $region5: #{tpu_custom_call.1} parent=1 // pred_fallthru
      _
    // Predicated region
    $region6: #{tpu_custom_call.1} parent=1 // pred_check
      _
    $region7: #{tpu_custom_call.1} parent=1 // pred_check_branch
      %18 = sbr.rel (0) target = $region9
    $region8: #{tpu_custom_call.1} parent=1 // pred_region
      %s20 = ssub.s32 3072, 3072
      %21 = vsyncadd [#allocation3], %s20
      %s22 = sshll.u32 [#allocation2], 4
      %s23 = int_to_ptr.vmem [resolvable:$true] %s22
      %28 = dma.hbm_to_vmem [thread:$0]  %s1, 3072, %s23, [#allocation3], 192, 192, 12
    $region9: #{tpu_custom_call.1} parent=1 // pred_fallthru
      _
    // Predicated region
    $region10: #{tpu_custom_call.1} parent=1 // pred_check
      _
    $region11: #{tpu_custom_call.1} parent=1 // pred_check_branch
      %30 = sbr.rel (0) target = $region13
    $region12: #{tpu_custom_call.1} parent=1 // pred_region
      _
    $region13: #{tpu_custom_call.1} parent=1 // pred_fallthru
      _
    // Predicated region
    $region14: #{tpu_custom_call.1} parent=1 // pred_check
      _
    $region15: #{tpu_custom_call.1} parent=1 // pred_check_branch
      %32 = sbr.rel (0) target = $region17
    $region16: #{tpu_custom_call.1} parent=1 // pred_region
      %s34 = ssub.s32 9216, 9216
      %35 = vsyncadd [#allocation6], %s34
      %s36 = sshll.u32 [#allocation5], 4
      %s37 = int_to_ptr.vmem [resolvable:$true] %s36
      %42 = dma.hbm_to_vmem [thread:$0]  %s3, 9216, %s37, [#allocation6], 192, 192, 12
    $region17: #{tpu_custom_call.1} parent=1 // pred_fallthru
      _
    // Predicated region
    $region18: #{tpu_custom_call.1} parent=1 // pred_check
      _
    $region19: #{tpu_custom_call.1} parent=1 // pred_check_branch
      %44 = sbr.rel (0) target = $region21
    $region20: #{tpu_custom_call.1} parent=1 // pred_region
      _
    $region21: #{tpu_custom_call.1} parent=1 // pred_fallthru
      _
    // Predicated region
    $region22: #{tpu_custom_call.1} parent=1 // pred_check
      _
    $region23: #{tpu_custom_call.1} parent=1 // pred_check_branch
      %46 = sbr.rel (0) target = $region25
    $region24: #{tpu_custom_call.1} parent=1 // pred_region
      %s48 = ssub.s32 3072, 3072
      %49 = vsyncadd [#allocation6], %s48
      %s50 = sshll.u32 [#allocation7], 4
      %s51 = int_to_ptr.vmem [resolvable:$true] %s50
      %56 = dma.hbm_to_vmem [thread:$0]  %s5, 3072, %s51, [#allocation6], 64, 64, 4
    $region25: #{tpu_custom_call.1} parent=1 // pred_fallthru
      _
    // Predicated region
    $region26: #{tpu_custom_call.1} parent=1 // pred_check
      _
    $region27: #{tpu_custom_call.1} parent=1 // pred_check_branch
      %58 = sbr.rel (0) target = $region29
    $region28: #{tpu_custom_call.1} parent=1 // pred_region
      _
    $region29: #{tpu_custom_call.1} parent=1 // pred_fallthru
      _
    // Predicated region
    $region30: #{tpu_custom_call.1} parent=1 // pred_check
      _
    $region31: #{tpu_custom_call.1} parent=1 // pred_check_branch
      %60 = sbr.rel (0) target = $region33
    $region32: #{tpu_custom_call.1} parent=1 // pred_region
      %61 = dma.done [#allocation3], 3072
    $region33: #{tpu_custom_call.1} parent=1 // pred_fallthru
      _
    // Predicated region
    $region34: #{tpu_custom_call.1} parent=1 // pred_check
      _
    $region35: #{tpu_custom_call.1} parent=1 // pred_check_branch
      %63 = sbr.rel (0) target = $region37
    $region36: #{tpu_custom_call.1} parent=1 // pred_region
      %64 = dma.done [#allocation6], 9216
    $region37: #{tpu_custom_call.1} parent=1 // pred_fallthru
      _
    // Predicated region
    $region38: #{tpu_custom_call.1} parent=1 // pred_check
      _
    $region39: #{tpu_custom_call.1} parent=1 // pred_check_branch
      %66 = sbr.rel (0) target = $region41
    $region40: #{tpu_custom_call.1} parent=1 // pred_region
      %67 = dma.done [#allocation6], 3072
    $region41: #{tpu_custom_call.1} parent=1 // pred_fallthru
      _
    %v69 = vld [vmem:[%s0] sm:$0xff]
    %v70 = vld [vmem:[%s0 + $0x8] sm:$0xff]
    %v71 = vlaneseq
    %v72 = vand.u32 %v71, 127
    %73 = vset.pattern.permute.xlu0 0
    %74 = vperm.xlu0 %73, %v69
    %v75 = vpop.permute.xlu0 %74
    %76 = vset.pattern.permute.xlu0 0
    %77 = vperm.xlu0 %76, %v70
    %v78 = vpop.permute.xlu0 %77
    %vm79 = vcmp.eq.s32.totalorder %v75, %v72
    %vm80 = vcmp.eq.s32.totalorder %v78, %v72
    %v81 = vsel %vm79, 1.0, 0.0
    %v82 = vsel %vm80, 1.0, 0.0
    %v83 = vadd.f32 %v81, 0.0
    %v84 = vadd.f32 %v82, 0.0
    %85 = vset.pattern.permute.xlu0 1
    %86 = vperm.xlu0 %85, %v69
    %v87 = vpop.permute.xlu0 %86
    %88 = vset.pattern.permute.xlu0 1
    %89 = vperm.xlu0 %88, %v70
    %v90 = vpop.permute.xlu0 %89
    %vm91 = vcmp.eq.s32.totalorder %v87, %v72
    %vm92 = vcmp.eq.s32.totalorder %v90, %v72
    %v93 = vsel %vm91, 1.0, 0.0
    %v94 = vsel %vm92, 1.0, 0.0
    %v95 = vadd.f32 %v83, %v93
    %v96 = vadd.f32 %v84, %v94
    %97 = vset.pattern.permute.xlu0 2
    %98 = vperm.xlu0 %97, %v69
    %v99 = vpop.permute.xlu0 %98
    %100 = vset.pattern.permute.xlu0 2
    %101 = vperm.xlu0 %100, %v70
    %v102 = vpop.permute.xlu0 %101
    %vm103 = vcmp.eq.s32.totalorder %v99, %v72
    %vm104 = vcmp.eq.s32.totalorder %v102, %v72
    %v105 = vsel %vm103, 1.0, 0.0
    %v106 = vsel %vm104, 1.0, 0.0
    %v107 = vadd.f32 %v95, %v105
    %v108 = vadd.f32 %v96, %v106
    %v109 = vpack.c.bf16 %v108, %v107
    %v110 = vld [vmem:[#allocation2] sm:$0xff]
    %v111 = vld [vmem:[#allocation2 + $0x8] sm:$0xf]
    %v112 = vld [vmem:[#allocation2 + $0xc] sm:$0xff]
    %v113 = vld [vmem:[#allocation2 + $0x14] sm:$0xf]
    %v114 = vld [vmem:[#allocation2 + $0x18] sm:$0xff]
    %v115 = vld [vmem:[#allocation2 + $0x20] sm:$0xf]
    %v116 = vld [vmem:[#allocation2 + $0x24] sm:$0xff]
    %v117 = vld [vmem:[#allocation2 + $0x2c] sm:$0xf]
    %v118 = vld [vmem:[#allocation2 + $0x30] sm:$0xff]
    %v119 = vld [vmem:[#allocation2 + $0x38] sm:$0xf]
    %v120 = vld [vmem:[#allocation2 + $0x3c] sm:$0xff]
    %v121 = vld [vmem:[#allocation2 + $0x44] sm:$0xf]
    %v122 = vld [vmem:[#allocation2 + $0x48] sm:$0xff]
    %v123 = vld [vmem:[#allocation2 + $0x50] sm:$0xf]
    %v124 = vld [vmem:[#allocation2 + $0x54] sm:$0xff]
    %v125 = vld [vmem:[#allocation2 + $0x5c] sm:$0xf]
    %v126 = vld [vmem:[#allocation2 + $0x60] sm:$0xff]
    %v127 = vld [vmem:[#allocation2 + $0x68] sm:$0xf]
    %v128 = vld [vmem:[#allocation2 + $0x6c] sm:$0xff]
    %v129 = vld [vmem:[#allocation2 + $0x74] sm:$0xf]
    %v130 = vld [vmem:[#allocation2 + $0x78] sm:$0xff]
    %v131 = vld [vmem:[#allocation2 + $0x80] sm:$0xf]
    %v132 = vld [vmem:[#allocation2 + $0x84] sm:$0xff]
    %v133 = vld [vmem:[#allocation2 + $0x8c] sm:$0xf]
    %v134 = vld [vmem:[#allocation2 + $0x90] sm:$0xff]
    %v135 = vld [vmem:[#allocation2 + $0x98] sm:$0xf]
    %v136 = vld [vmem:[#allocation2 + $0x9c] sm:$0xff]
    %v137 = vld [vmem:[#allocation2 + $0xa4] sm:$0xf]
    %v138 = vld [vmem:[#allocation2 + $0xa8] sm:$0xff]
    %v139 = vld [vmem:[#allocation2 + $0xb0] sm:$0xf]
    %v140 = vld [vmem:[#allocation2 + $0xb4] sm:$0xff]
    %v141 = vld [vmem:[#allocation2 + $0xbc] sm:$0xf]
    %v142 = vld [vmem:[%s2] sm:$0x7]
    %v144 = vlaneseq
    %v145 = vshrl.u32 %v144, 7
    %v146 = vsub.s32 0, %v145
    %v147 = vrot.slane %v142, %v146
    %v148 = vlaneseq
    %v149 = vshrl.u32 %v148, 7
    %v150 = vsub.s32 1, %v149
    %v151 = vrot.slane %v142, %v150
    %v152 = vlaneseq
    %v153 = vshrl.u32 %v152, 7
    %v154 = vsub.s32 2, %v153
    %v155 = vrot.slane %v142, %v154
    %v191 = vunpack.c.l.b16 %v110
    %v192 = vunpack.c.h.b16 %v110
    %v193 = vunpack.c.l.b16 %v111
    %v194 = vunpack.c.l.b16 %v112
    %v195 = vunpack.c.h.b16 %v112
    %v196 = vunpack.c.l.b16 %v113
    %v197 = vunpack.c.l.b16 %v114
    %v198 = vunpack.c.h.b16 %v114
    %v199 = vunpack.c.l.b16 %v115
    %v200 = vunpack.c.l.b16 %v116
    %v201 = vunpack.c.h.b16 %v116
    %v202 = vunpack.c.l.b16 %v117
    %v203 = vunpack.c.l.b16 %v118
    %v204 = vunpack.c.h.b16 %v118
    %v205 = vunpack.c.l.b16 %v119
    %v206 = vunpack.c.l.b16 %v120
    %v207 = vunpack.c.h.b16 %v120
    %v208 = vunpack.c.l.b16 %v121
    %v209 = vunpack.c.l.b16 %v122
    %v210 = vunpack.c.h.b16 %v122
    %v211 = vunpack.c.l.b16 %v123
    %v212 = vunpack.c.l.b16 %v124
    %v213 = vunpack.c.h.b16 %v124
    %v214 = vunpack.c.l.b16 %v125
    %v215 = vunpack.c.l.b16 %v126
    %v216 = vunpack.c.h.b16 %v126
    %v217 = vunpack.c.l.b16 %v127
    %v218 = vunpack.c.l.b16 %v128
    %v219 = vunpack.c.h.b16 %v128
    %v220 = vunpack.c.l.b16 %v129
    %v221 = vunpack.c.l.b16 %v130
    %v222 = vunpack.c.h.b16 %v130
    %v223 = vunpack.c.l.b16 %v131
    %v224 = vunpack.c.l.b16 %v132
    %v225 = vunpack.c.h.b16 %v132
    %v226 = vunpack.c.l.b16 %v133
    %v227 = vunpack.c.l.b16 %v134
    %v228 = vunpack.c.h.b16 %v134
    %v229 = vunpack.c.l.b16 %v135
    %v230 = vunpack.c.l.b16 %v136
    %v231 = vunpack.c.h.b16 %v136
    %v232 = vunpack.c.l.b16 %v137
    %v233 = vunpack.c.l.b16 %v138
    %v234 = vunpack.c.h.b16 %v138
    %v235 = vunpack.c.l.b16 %v139
    %v236 = vunpack.c.l.b16 %v140
    %v237 = vunpack.c.h.b16 %v140
    %v238 = vunpack.c.l.b16 %v141
    %v239 = vpack.c.b16 %v194, %v191
    %v240 = vpack.c.b16 %v195, %v192
    %v241 = vpack.c.b16 %v196, %v193
    %v242 = vpack.c.b16 %v200, %v197
    %v243 = vpack.c.b16 %v201, %v198
    %v244 = vpack.c.b16 %v202, %v199
    %v245 = vpack.c.b16 %v206, %v203
    %v246 = vpack.c.b16 %v207, %v204
    %v247 = vpack.c.b16 %v208, %v205
    %v248 = vpack.c.b16 %v212, %v209
    %v249 = vpack.c.b16 %v213, %v210
    %v250 = vpack.c.b16 %v214, %v211
    %v251 = vpack.c.b16 %v218, %v215
    %v252 = vpack.c.b16 %v219, %v216
    %v253 = vpack.c.b16 %v220, %v217
    %v254 = vpack.c.b16 %v224, %v221
    %v255 = vpack.c.b16 %v225, %v222
    %v256 = vpack.c.b16 %v226, %v223
    %v257 = vpack.c.b16 %v230, %v227
    %v258 = vpack.c.b16 %v231, %v228
    %v259 = vpack.c.b16 %v232, %v229
    %v260 = vpack.c.b16 %v236, %v233
    %v261 = vpack.c.b16 %v237, %v234
    %v262 = vpack.c.b16 %v238, %v235
    %287 = vmatprep.subr.bf16.mxu0 %v240
    %288 = vmatpush1.bf16.msra.mxu0 %v239
    %289 = vmatprep.subr.bf16.mxu0 %v243
    %290 = vmatpush1.bf16.msra.mxu0 %v242
    %291 = vmatprep.subr.bf16.mxu0 %v246
    %292 = vmatpush1.bf16.msra.mxu0 %v245
    %293 = vmatprep.subr.bf16.mxu0 %v249
    %294 = vmatpush1.bf16.msra.mxu0 %v248
    %295 = vmatprep.subr.bf16.mxu0 %v252
    %296 = vmatpush1.bf16.msra.mxu0 %v251
    %297 = vmatprep.subr.bf16.mxu0 %v255
    %298 = vmatpush1.bf16.msra.mxu0 %v254
    %299 = vmatprep.subr.bf16.mxu0 %v258
    %300 = vmatpush1.bf16.msra.mxu0 %v257
    %301 = vmatprep.subr.bf16.mxu0 %v261
    %302 = vmatpush1.bf16.msra.mxu0 %v260
    %303 = vmatprep.subr.bf16.mxu0 0
    %304 = vmatpush1.bf16.msra.mxu0 0
    %305 = vmatprep.subr.bf16.mxu0 0
    %306 = vmatpush1.bf16.msra.mxu0 0
    %307 = vmatprep.subr.bf16.mxu0 0
    %308 = vmatpush1.bf16.msra.mxu0 0
    %309 = vmatprep.subr.bf16.mxu0 0
    %310 = vmatpush1.bf16.msra.mxu0 0
    %311 = vmatprep.subr.bf16.mxu0 0
    %312 = vmatpush1.bf16.msra.mxu0 0
    %313 = vmatprep.subr.bf16.mxu0 0
    %314 = vmatpush1.bf16.msra.mxu0 0
    %315 = vmatprep.subr.bf16.mxu0 0
    %316 = vmatpush1.bf16.msra.mxu0 0
    %317 = vmatprep.subr.bf16.mxu0 0
    %318 = vmatpush1.bf16.msra.mxu0 0
    %319 = vmatprep.mubr.bf16.mxu0 0
    %320 = vmatmul.mubr.bf16.gmra.mrb[0].mxu0 %v109
    %v321 = vpop.f32.mrb[0].mxu0
    %v322 = vadd.f32 %v147, %v321
    %v323 = vpop.f32.mrb[0].mxu0
    %v324 = vadd.f32 %v151, %v323
    %v325 = vpop.f32.mrb[0].mxu0
    %v326 = vadd.f32 %v147, %v325
    %v327 = vpop.f32.mrb[0].mxu0
    %v328 = vadd.f32 %v151, %v327
    %329 = vdwg.mxu0
    %330 = vmatprep.subr.bf16.mxu0 0
    %331 = vmatpush1.bf16.msra.mxu0 %v241
    %332 = vmatprep.subr.bf16.mxu0 0
    %333 = vmatpush1.bf16.msra.mxu0 %v244
    %334 = vmatprep.subr.bf16.mxu0 0
    %335 = vmatpush1.bf16.msra.mxu0 %v247
    %336 = vmatprep.subr.bf16.mxu0 0
    %337 = vmatpush1.bf16.msra.mxu0 %v250
    %338 = vmatprep.subr.bf16.mxu0 0
    %339 = vmatpush1.bf16.msra.mxu0 %v253
    %340 = vmatprep.subr.bf16.mxu0 0
    %341 = vmatpush1.bf16.msra.mxu0 %v256
    %342 = vmatprep.subr.bf16.mxu0 0
    %343 = vmatpush1.bf16.msra.mxu0 %v259
    %344 = vmatprep.subr.bf16.mxu0 0
    %345 = vmatpush1.bf16.msra.mxu0 %v262
    %346 = vmatprep.subr.bf16.mxu0 0
    %347 = vmatpush1.bf16.msra.mxu0 0
    %348 = vmatprep.subr.bf16.mxu0 0
    %349 = vmatpush1.bf16.msra.mxu0 0
    %350 = vmatprep.subr.bf16.mxu0 0
    %351 = vmatpush1.bf16.msra.mxu0 0
    %352 = vmatprep.subr.bf16.mxu0 0
    %353 = vmatpush1.bf16.msra.mxu0 0
    %354 = vmatprep.subr.bf16.mxu0 0
    %355 = vmatpush1.bf16.msra.mxu0 0
    %356 = vmatprep.subr.bf16.mxu0 0
    %357 = vmatpush1.bf16.msra.mxu0 0
    %358 = vmatprep.subr.bf16.mxu0 0
    %359 = vmatpush1.bf16.msra.mxu0 0
    %360 = vmatprep.subr.bf16.mxu0 0
    %361 = vmatpush1.bf16.msra.mxu0 0
    %362 = vmatprep.mubr.bf16.mxu0 0
    %363 = vmatmul.mubr.bf16.gmra.mrb[0].mxu0 %v109
    %v364 = vpop.f32.mrb[0].mxu0
    %v365 = vadd.f32 %v155, %v364
    %v366 = vpop.f32.mrb[0].mxu0
    %v367 = vpop.f32.mrb[0].mxu0
    %v368 = vadd.f32 %v155, %v367
    %v369 = vpop.f32.mrb[0].mxu0
    %370 = vdwg.mxu0
    %v371 = vmax.f32 %v322, 0.0
    %v372 = vmax.f32 %v324, 0.0
    %v373 = vmax.f32 %v365, 0.0
    %v374 = vmax.f32 %v326, 0.0
    %v375 = vmax.f32 %v328, 0.0
    %v376 = vmax.f32 %v368, 0.0
    %v377 = vpack.c.bf16 %v374, %v371
    %v378 = vpack.c.bf16 %v375, %v372
    %v379 = vpack.c.bf16 %v376, %v373
    %v380 = vld [vmem:[#allocation5] sm:$0xff]
    %v381 = vld [vmem:[#allocation5 + $0x8] sm:$0xf]
    %v382 = vld [vmem:[#allocation5 + $0xc] sm:$0xff]
    %v383 = vld [vmem:[#allocation5 + $0x14] sm:$0xf]
    %v384 = vld [vmem:[#allocation5 + $0x18] sm:$0xff]
    %v385 = vld [vmem:[#allocation5 + $0x20] sm:$0xf]
    %v386 = vld [vmem:[#allocation5 + $0x24] sm:$0xff]
    %v387 = vld [vmem:[#allocation5 + $0x2c] sm:$0xf]
    %v388 = vld [vmem:[#allocation5 + $0x30] sm:$0xff]
    %v389 = vld [vmem:[#allocation5 + $0x38] sm:$0xf]
    %v390 = vld [vmem:[#allocation5 + $0x3c] sm:$0xff]
    %v391 = vld [vmem:[#allocation5 + $0x44] sm:$0xf]
    %v392 = vld [vmem:[#allocation5 + $0x48] sm:$0xff]
    %v393 = vld [vmem:[#allocation5 + $0x50] sm:$0xf]
    %v394 = vld [vmem:[#allocation5 + $0x54] sm:$0xff]
    %v395 = vld [vmem:[#allocation5 + $0x5c] sm:$0xf]
    %v396 = vld [vmem:[#allocation5 + $0x60] sm:$0xff]
    %v397 = vld [vmem:[#allocation5 + $0x68] sm:$0xf]
    %v398 = vld [vmem:[#allocation5 + $0x6c] sm:$0xff]
    %v399 = vld [vmem:[#allocation5 + $0x74] sm:$0xf]
    %v400 = vld [vmem:[#allocation5 + $0x78] sm:$0xff]
    %v401 = vld [vmem:[#allocation5 + $0x80] sm:$0xf]
    %v402 = vld [vmem:[#allocation5 + $0x84] sm:$0xff]
    %v403 = vld [vmem:[#allocation5 + $0x8c] sm:$0xf]
    %v404 = vld [vmem:[#allocation5 + $0x90] sm:$0xff]
    %v405 = vld [vmem:[#allocation5 + $0x98] sm:$0xf]
    %v406 = vld [vmem:[#allocation5 + $0x9c] sm:$0xff]
    %v407 = vld [vmem:[#allocation5 + $0xa4] sm:$0xf]
    %v408 = vld [vmem:[#allocation5 + $0xa8] sm:$0xff]
    %v409 = vld [vmem:[#allocation5 + $0xb0] sm:$0xf]
    %v410 = vld [vmem:[#allocation5 + $0xb4] sm:$0xff]
    %v411 = vld [vmem:[#allocation5 + $0xbc] sm:$0xf]
    %v412 = vld [vmem:[#allocation5 + $0xc0] sm:$0xff]
    %v413 = vld [vmem:[#allocation5 + $0xc8] sm:$0xf]
    %v414 = vld [vmem:[#allocation5 + $0xcc] sm:$0xff]
    %v415 = vld [vmem:[#allocation5 + $0xd4] sm:$0xf]
    %v416 = vld [vmem:[#allocation5 + $0xd8] sm:$0xff]
    %v417 = vld [vmem:[#allocation5 + $0xe0] sm:$0xf]
    %v418 = vld [vmem:[#allocation5 + $0xe4] sm:$0xff]
    %v419 = vld [vmem:[#allocation5 + $0xec] sm:$0xf]
    %v420 = vld [vmem:[#allocation5 + $0xf0] sm:$0xff]
    %v421 = vld [vmem:[#allocation5 + $0xf8] sm:$0xf]
    %v422 = vld [vmem:[#allocation5 + $0xfc] sm:$0xff]
    %v423 = vld [vmem:[#allocation5 + $0x104] sm:$0xf]
    %v424 = vld [vmem:[#allocation5 + $0x108] sm:$0xff]
    %v425 = vld [vmem:[#allocation5 + $0x110] sm:$0xf]
    %v426 = vld [vmem:[#allocation5 + $0x114] sm:$0xff]
    %v427 = vld [vmem:[#allocation5 + $0x11c] sm:$0xf]
    %v428 = vld [vmem:[#allocation5 + $0x120] sm:$0xff]
    %v429 = vld [vmem:[#allocation5 + $0x128] sm:$0xf]
    %v430 = vld [vmem:[#allocation5 + $0x12c] sm:$0xff]
    %v431 = vld [vmem:[#allocation5 + $0x134] sm:$0xf]
    %v432 = vld [vmem:[#allocation5 + $0x138] sm:$0xff]
    %v433 = vld [vmem:[#allocation5 + $0x140] sm:$0xf]
    %v434 = vld [vmem:[#allocation5 + $0x144] sm:$0xff]
    %v435 = vld [vmem:[#allocation5 + $0x14c] sm:$0xf]
    %v436 = vld [vmem:[#allocation5 + $0x150] sm:$0xff]
    %v437 = vld [vmem:[#allocation5 + $0x158] sm:$0xf]
    %v438 = vld [vmem:[#allocation5 + $0x15c] sm:$0xff]
    %v439 = vld [vmem:[#allocation5 + $0x164] sm:$0xf]
    %v440 = vld [vmem:[#allocation5 + $0x168] sm:$0xff]
    %v441 = vld [vmem:[#allocation5 + $0x170] sm:$0xf]
    %v442 = vld [vmem:[#allocation5 + $0x174] sm:$0xff]
    %v443 = vld [vmem:[#allocation5 + $0x17c] sm:$0xf]
    %v444 = vld [vmem:[#allocation5 + $0x180] sm:$0xff]
    %v445 = vld [vmem:[#allocation5 + $0x188] sm:$0xf]
    %v446 = vld [vmem:[#allocation5 + $0x18c] sm:$0xff]
    %v447 = vld [vmem:[#allocation5 + $0x194] sm:$0xf]
    %v448 = vld [vmem:[#allocation5 + $0x198] sm:$0xff]
    %v449 = vld [vmem:[#allocation5 + $0x1a0] sm:$0xf]
    %v450 = vld [vmem:[#allocation5 + $0x1a4] sm:$0xff]
    %v451 = vld [vmem:[#allocation5 + $0x1ac] sm:$0xf]
    %v452 = vld [vmem:[#allocation5 + $0x1b0] sm:$0xff]
    %v453 = vld [vmem:[#allocation5 + $0x1b8] sm:$0xf]
    %v454 = vld [vmem:[#allocation5 + $0x1bc] sm:$0xff]
    %v455 = vld [vmem:[#allocation5 + $0x1c4] sm:$0xf]
    %v456 = vld [vmem:[#allocation5 + $0x1c8] sm:$0xff]
    %v457 = vld [vmem:[#allocation5 + $0x1d0] sm:$0xf]
    %v458 = vld [vmem:[#allocation5 + $0x1d4] sm:$0xff]
    %v459 = vld [vmem:[#allocation5 + $0x1dc] sm:$0xf]
    %v460 = vld [vmem:[#allocation5 + $0x1e0] sm:$0xff]
    %v461 = vld [vmem:[#allocation5 + $0x1e8] sm:$0xf]
    %v462 = vld [vmem:[#allocation5 + $0x1ec] sm:$0xff]
    %v463 = vld [vmem:[#allocation5 + $0x1f4] sm:$0xf]
    %v464 = vld [vmem:[#allocation5 + $0x1f8] sm:$0xff]
    %v465 = vld [vmem:[#allocation5 + $0x200] sm:$0xf]
    %v466 = vld [vmem:[#allocation5 + $0x204] sm:$0xff]
    %v467 = vld [vmem:[#allocation5 + $0x20c] sm:$0xf]
    %v468 = vld [vmem:[#allocation5 + $0x210] sm:$0xff]
    %v469 = vld [vmem:[#allocation5 + $0x218] sm:$0xf]
    %v470 = vld [vmem:[#allocation5 + $0x21c] sm:$0xff]
    %v471 = vld [vmem:[#allocation5 + $0x224] sm:$0xf]
    %v472 = vld [vmem:[#allocation5 + $0x228] sm:$0xff]
    %v473 = vld [vmem:[#allocation5 + $0x230] sm:$0xf]
    %v474 = vld [vmem:[#allocation5 + $0x234] sm:$0xff]
    %v475 = vld [vmem:[#allocation5 + $0x23c] sm:$0xf]
    %v476 = vld [vmem:[%s4] sm:$0x7]
    %v478 = vlaneseq
    %v479 = vshrl.u32 %v478, 7
    %v480 = vsub.s32 0, %v479
    %v481 = vrot.slane %v476, %v480
    %v482 = vlaneseq
    %v483 = vshrl.u32 %v482, 7
    %v484 = vsub.s32 1, %v483
    %v485 = vrot.slane %v476, %v484
    %v486 = vlaneseq
    %v487 = vshrl.u32 %v486, 7
    %v488 = vsub.s32 2, %v487
    %v489 = vrot.slane %v476, %v488
    %v589 = vunpack.c.l.b16 %v380
    %v590 = vunpack.c.h.b16 %v380
    %v591 = vunpack.c.l.b16 %v381
    %v592 = vunpack.c.l.b16 %v382
    %v593 = vunpack.c.h.b16 %v382
    %v594 = vunpack.c.l.b16 %v383
    %v595 = vunpack.c.l.b16 %v384
    %v596 = vunpack.c.h.b16 %v384
    %v597 = vunpack.c.l.b16 %v385
    %v598 = vunpack.c.l.b16 %v386
    %v599 = vunpack.c.h.b16 %v386
    %v600 = vunpack.c.l.b16 %v387
    %v601 = vunpack.c.l.b16 %v388
    %v602 = vunpack.c.h.b16 %v388
    %v603 = vunpack.c.l.b16 %v389
    %v604 = vunpack.c.l.b16 %v390
    %v605 = vunpack.c.h.b16 %v390
    %v606 = vunpack.c.l.b16 %v391
    %v607 = vunpack.c.l.b16 %v392
    %v608 = vunpack.c.h.b16 %v392
    %v609 = vunpack.c.l.b16 %v393
    %v610 = vunpack.c.l.b16 %v394
    %v611 = vunpack.c.h.b16 %v394
    %v612 = vunpack.c.l.b16 %v395
    %v613 = vunpack.c.l.b16 %v396
    %v614 = vunpack.c.h.b16 %v396
    %v615 = vunpack.c.l.b16 %v397
    %v616 = vunpack.c.l.b16 %v398
    %v617 = vunpack.c.h.b16 %v398
    %v618 = vunpack.c.l.b16 %v399
    %v619 = vunpack.c.l.b16 %v400
    %v620 = vunpack.c.h.b16 %v400
    %v621 = vunpack.c.l.b16 %v401
    %v622 = vunpack.c.l.b16 %v402
    %v623 = vunpack.c.h.b16 %v402
    %v624 = vunpack.c.l.b16 %v403
    %v625 = vunpack.c.l.b16 %v404
    %v626 = vunpack.c.h.b16 %v404
    %v627 = vunpack.c.l.b16 %v405
    %v628 = vunpack.c.l.b16 %v406
    %v629 = vunpack.c.h.b16 %v406
    %v630 = vunpack.c.l.b16 %v407
    %v631 = vunpack.c.l.b16 %v408
    %v632 = vunpack.c.h.b16 %v408
    %v633 = vunpack.c.l.b16 %v409
    %v634 = vunpack.c.l.b16 %v410
    %v635 = vunpack.c.h.b16 %v410
    %v636 = vunpack.c.l.b16 %v411
    %v637 = vunpack.c.l.b16 %v412
    %v638 = vunpack.c.h.b16 %v412
    %v639 = vunpack.c.l.b16 %v413
    %v640 = vunpack.c.l.b16 %v414
    %v641 = vunpack.c.h.b16 %v414
    %v642 = vunpack.c.l.b16 %v415
    %v643 = vunpack.c.l.b16 %v416
    %v644 = vunpack.c.h.b16 %v416
    %v645 = vunpack.c.l.b16 %v417
    %v646 = vunpack.c.l.b16 %v418
    %v647 = vunpack.c.h.b16 %v418
    %v648 = vunpack.c.l.b16 %v419
    %v649 = vunpack.c.l.b16 %v420
    %v650 = vunpack.c.h.b16 %v420
    %v651 = vunpack.c.l.b16 %v421
    %v652 = vunpack.c.l.b16 %v422
    %v653 = vunpack.c.h.b16 %v422
    %v654 = vunpack.c.l.b16 %v423
    %v655 = vunpack.c.l.b16 %v424
    %v656 = vunpack.c.h.b16 %v424
    %v657 = vunpack.c.l.b16 %v425
    %v658 = vunpack.c.l.b16 %v426
    %v659 = vunpack.c.h.b16 %v426
    %v660 = vunpack.c.l.b16 %v427
    %v661 = vunpack.c.l.b16 %v428
    %v662 = vunpack.c.h.b16 %v428
    %v663 = vunpack.c.l.b16 %v429
    %v664 = vunpack.c.l.b16 %v430
    %v665 = vunpack.c.h.b16 %v430
    %v666 = vunpack.c.l.b16 %v431
    %v667 = vunpack.c.l.b16 %v432
    %v668 = vunpack.c.h.b16 %v432
    %v669 = vunpack.c.l.b16 %v433
    %v670 = vunpack.c.l.b16 %v434
    %v671 = vunpack.c.h.b16 %v434
    %v672 = vunpack.c.l.b16 %v435
    %v673 = vunpack.c.l.b16 %v436
    %v674 = vunpack.c.h.b16 %v436
    %v675 = vunpack.c.l.b16 %v437
    %v676 = vunpack.c.l.b16 %v438
    %v677 = vunpack.c.h.b16 %v438
    %v678 = vunpack.c.l.b16 %v439
    %v679 = vunpack.c.l.b16 %v440
    %v680 = vunpack.c.h.b16 %v440
    %v681 = vunpack.c.l.b16 %v441
    %v682 = vunpack.c.l.b16 %v442
    %v683 = vunpack.c.h.b16 %v442
    %v684 = vunpack.c.l.b16 %v443
    %v685 = vunpack.c.l.b16 %v444
    %v686 = vunpack.c.h.b16 %v444
    %v687 = vunpack.c.l.b16 %v445
    %v688 = vunpack.c.l.b16 %v446
    %v689 = vunpack.c.h.b16 %v446
    %v690 = vunpack.c.l.b16 %v447
    %v691 = vunpack.c.l.b16 %v448
    %v692 = vunpack.c.h.b16 %v448
    %v693 = vunpack.c.l.b16 %v449
    %v694 = vunpack.c.l.b16 %v450
    %v695 = vunpack.c.h.b16 %v450
    %v696 = vunpack.c.l.b16 %v451
    %v697 = vunpack.c.l.b16 %v452
    %v698 = vunpack.c.h.b16 %v452
    %v699 = vunpack.c.l.b16 %v453
    %v700 = vunpack.c.l.b16 %v454
    %v701 = vunpack.c.h.b16 %v454
    %v702 = vunpack.c.l.b16 %v455
    %v703 = vunpack.c.l.b16 %v456
    %v704 = vunpack.c.h.b16 %v456
    %v705 = vunpack.c.l.b16 %v457
    %v706 = vunpack.c.l.b16 %v458
    %v707 = vunpack.c.h.b16 %v458
    %v708 = vunpack.c.l.b16 %v459
    %v709 = vunpack.c.l.b16 %v460
    %v710 = vunpack.c.h.b16 %v460
    %v711 = vunpack.c.l.b16 %v461
    %v712 = vunpack.c.l.b16 %v462
    %v713 = vunpack.c.h.b16 %v462
    %v714 = vunpack.c.l.b16 %v463
    %v715 = vunpack.c.l.b16 %v464
    %v716 = vunpack.c.h.b16 %v464
    %v717 = vunpack.c.l.b16 %v465
    %v718 = vunpack.c.l.b16 %v466
    %v719 = vunpack.c.h.b16 %v466
    %v720 = vunpack.c.l.b16 %v467
    %v721 = vunpack.c.l.b16 %v468
    %v722 = vunpack.c.h.b16 %v468
    %v723 = vunpack.c.l.b16 %v469
    %v724 = vunpack.c.l.b16 %v470
    %v725 = vunpack.c.h.b16 %v470
    %v726 = vunpack.c.l.b16 %v471
    %v727 = vunpack.c.l.b16 %v472
    %v728 = vunpack.c.h.b16 %v472
    %v729 = vunpack.c.l.b16 %v473
    %v730 = vunpack.c.l.b16 %v474
    %v731 = vunpack.c.h.b16 %v474
    %v732 = vunpack.c.l.b16 %v475
    %v733 = vpack.c.b16 %v592, %v589
    %v734 = vpack.c.b16 %v593, %v590
    %v735 = vpack.c.b16 %v594, %v591
    %v736 = vpack.c.b16 %v598, %v595
    %v737 = vpack.c.b16 %v599, %v596
    %v738 = vpack.c.b16 %v600, %v597
    %v739 = vpack.c.b16 %v604, %v601
    %v740 = vpack.c.b16 %v605, %v602
    %v741 = vpack.c.b16 %v606, %v603
    %v742 = vpack.c.b16 %v610, %v607
    %v743 = vpack.c.b16 %v611, %v608
    %v744 = vpack.c.b16 %v612, %v609
    %v745 = vpack.c.b16 %v616, %v613
    %v746 = vpack.c.b16 %v617, %v614
    %v747 = vpack.c.b16 %v618, %v615
    %v748 = vpack.c.b16 %v622, %v619
    %v749 = vpack.c.b16 %v623, %v620
    %v750 = vpack.c.b16 %v624, %v621
    %v751 = vpack.c.b16 %v628, %v625
    %v752 = vpack.c.b16 %v629, %v626
    %v753 = vpack.c.b16 %v630, %v627
    %v754 = vpack.c.b16 %v634, %v631
    %v755 = vpack.c.b16 %v635, %v632
    %v756 = vpack.c.b16 %v636, %v633
    %v757 = vpack.c.b16 %v640, %v637
    %v758 = vpack.c.b16 %v641, %v638
    %v759 = vpack.c.b16 %v642, %v639
    %v760 = vpack.c.b16 %v646, %v643
    %v761 = vpack.c.b16 %v647, %v644
    %v762 = vpack.c.b16 %v648, %v645
    %v763 = vpack.c.b16 %v652, %v649
    %v764 = vpack.c.b16 %v653, %v650
    %v765 = vpack.c.b16 %v654, %v651
    %v766 = vpack.c.b16 %v658, %v655
    %v767 = vpack.c.b16 %v659, %v656
    %v768 = vpack.c.b16 %v660, %v657
    %v769 = vpack.c.b16 %v664, %v661
    %v770 = vpack.c.b16 %v665, %v662
    %v771 = vpack.c.b16 %v666, %v663
    %v772 = vpack.c.b16 %v670, %v667
    %v773 = vpack.c.b16 %v671, %v668
    %v774 = vpack.c.b16 %v672, %v669
    %v775 = vpack.c.b16 %v676, %v673
    %v776 = vpack.c.b16 %v677, %v674
    %v777 = vpack.c.b16 %v678, %v675
    %v778 = vpack.c.b16 %v682, %v679
    %v779 = vpack.c.b16 %v683, %v680
    %v780 = vpack.c.b16 %v684, %v681
    %v781 = vpack.c.b16 %v688, %v685
    %v782 = vpack.c.b16 %v689, %v686
    %v783 = vpack.c.b16 %v690, %v687
    %v784 = vpack.c.b16 %v694, %v691
    %v785 = vpack.c.b16 %v695, %v692
    %v786 = vpack.c.b16 %v696, %v693
    %v787 = vpack.c.b16 %v700, %v697
    %v788 = vpack.c.b16 %v701, %v698
    %v789 = vpack.c.b16 %v702, %v699
    %v790 = vpack.c.b16 %v706, %v703
    %v791 = vpack.c.b16 %v707, %v704
    %v792 = vpack.c.b16 %v708, %v705
    %v793 = vpack.c.b16 %v712, %v709
    %v794 = vpack.c.b16 %v713, %v710
    %v795 = vpack.c.b16 %v714, %v711
    %v796 = vpack.c.b16 %v718, %v715
    %v797 = vpack.c.b16 %v719, %v716
    %v798 = vpack.c.b16 %v720, %v717
    %v799 = vpack.c.b16 %v724, %v721
    %v800 = vpack.c.b16 %v725, %v722
    %v801 = vpack.c.b16 %v726, %v723
    %v802 = vpack.c.b16 %v730, %v727
    %v803 = vpack.c.b16 %v731, %v728
    %v804 = vpack.c.b16 %v732, %v729
    %877 = vmatprep.subr.bf16.mxu0 %v734
    %878 = vmatpush1.bf16.msra.mxu0 %v733
    %879 = vmatprep.subr.bf16.mxu0 %v737
    %880 = vmatpush1.bf16.msra.mxu0 %v736
    %881 = vmatprep.subr.bf16.mxu0 %v740
    %882 = vmatpush1.bf16.msra.mxu0 %v739
    %883 = vmatprep.subr.bf16.mxu0 %v743
    %884 = vmatpush1.bf16.msra.mxu0 %v742
    %885 = vmatprep.subr.bf16.mxu0 %v746
    %886 = vmatpush1.bf16.msra.mxu0 %v745
    %887 = vmatprep.subr.bf16.mxu0 %v749
    %888 = vmatpush1.bf16.msra.mxu0 %v748
    %889 = vmatprep.subr.bf16.mxu0 %v752
    %890 = vmatpush1.bf16.msra.mxu0 %v751
    %891 = vmatprep.subr.bf16.mxu0 %v755
    %892 = vmatpush1.bf16.msra.mxu0 %v754
    %893 = vmatprep.subr.bf16.mxu0 %v758
    %894 = vmatpush1.bf16.msra.mxu0 %v757
    %895 = vmatprep.subr.bf16.mxu0 %v761
    %896 = vmatpush1.bf16.msra.mxu0 %v760
    %897 = vmatprep.subr.bf16.mxu0 %v764
    %898 = vmatpush1.bf16.msra.mxu0 %v763
    %899 = vmatprep.subr.bf16.mxu0 %v767
    %900 = vmatpush1.bf16.msra.mxu0 %v766
    %901 = vmatprep.subr.bf16.mxu0 %v770
    %902 = vmatpush1.bf16.msra.mxu0 %v769
    %903 = vmatprep.subr.bf16.mxu0 %v773
    %904 = vmatpush1.bf16.msra.mxu0 %v772
    %905 = vmatprep.subr.bf16.mxu0 %v776
    %906 = vmatpush1.bf16.msra.mxu0 %v775
    %907 = vmatprep.subr.bf16.mxu0 %v779
    %908 = vmatpush1.bf16.msra.mxu0 %v778
    %909 = vmatprep.mubr.bf16.mxu0 %v378
    %910 = vmatmul.mubr.bf16.gmra.mrb[0].mxu0 %v377
    %v911 = vpop.f32.mrb[0].mxu0
    %v912 = vadd.f32 %v481, %v911
    %v913 = vpop.f32.mrb[0].mxu0
    %v914 = vadd.f32 %v485, %v913
    %v915 = vpop.f32.mrb[0].mxu0
    %v916 = vadd.f32 %v481, %v915
    %v917 = vpop.f32.mrb[0].mxu0
    %v918 = vadd.f32 %v485, %v917
    %919 = vdwg.mxu0
    %920 = vmatprep.subr.bf16.mxu0 %v782
    %921 = vmatpush1.bf16.msra.mxu0 %v781
    %922 = vmatprep.subr.bf16.mxu0 %v785
    %923 = vmatpush1.bf16.msra.mxu0 %v784
    %924 = vmatprep.subr.bf16.mxu0 %v788
    %925 = vmatpush1.bf16.msra.mxu0 %v787
    %926 = vmatprep.subr.bf16.mxu0 %v791
    %927 = vmatpush1.bf16.msra.mxu0 %v790
    %928 = vmatprep.subr.bf16.mxu0 %v794
    %929 = vmatpush1.bf16.msra.mxu0 %v793
    %930 = vmatprep.subr.bf16.mxu0 %v797
    %931 = vmatpush1.bf16.msra.mxu0 %v796
    %932 = vmatprep.subr.bf16.mxu0 %v800
    %933 = vmatpush1.bf16.msra.mxu0 %v799
    %934 = vmatprep.subr.bf16.mxu0 %v803
    %935 = vmatpush1.bf16.msra.mxu0 %v802
    %936 = vmatprep.subr.bf16.mxu0 0
    %937 = vmatpush1.bf16.msra.mxu0 0
    %938 = vmatprep.subr.bf16.mxu0 0
    %939 = vmatpush1.bf16.msra.mxu0 0
    %940 = vmatprep.subr.bf16.mxu0 0
    %941 = vmatpush1.bf16.msra.mxu0 0
    %942 = vmatprep.subr.bf16.mxu0 0
    %943 = vmatpush1.bf16.msra.mxu0 0
    %944 = vmatprep.subr.bf16.mxu0 0
    %945 = vmatpush1.bf16.msra.mxu0 0
    %946 = vmatprep.subr.bf16.mxu0 0
    %947 = vmatpush1.bf16.msra.mxu0 0
    %948 = vmatprep.subr.bf16.mxu0 0
    %949 = vmatpush1.bf16.msra.mxu0 0
    %950 = vmatprep.subr.bf16.mxu0 0
    %951 = vmatpush1.bf16.msra.mxu0 0
    %952 = vmatprep.mubr.bf16.mxu0 0
    %953 = vmatmul.mubr.bf16.gmra.mrb[0].mxu0 %v379
    %v954 = vpop.f32.mrb[0].mxu0
    %v955 = vadd.f32 %v912, %v954
    %v956 = vpop.f32.mrb[0].mxu0
    %v957 = vadd.f32 %v914, %v956
    %v958 = vpop.f32.mrb[0].mxu0
    %v959 = vadd.f32 %v916, %v958
    %v960 = vpop.f32.mrb[0].mxu0
    %v961 = vadd.f32 %v918, %v960
    %962 = vdwg.mxu0
    %963 = vmatprep.subr.bf16.mxu0 0
    %964 = vmatpush1.bf16.msra.mxu0 %v735
    %965 = vmatprep.subr.bf16.mxu0 0
    %966 = vmatpush1.bf16.msra.mxu0 %v738
    %967 = vmatprep.subr.bf16.mxu0 0
    %968 = vmatpush1.bf16.msra.mxu0 %v741
    %969 = vmatprep.subr.bf16.mxu0 0
    %970 = vmatpush1.bf16.msra.mxu0 %v744
    %971 = vmatprep.subr.bf16.mxu0 0
    %972 = vmatpush1.bf16.msra.mxu0 %v747
    %973 = vmatprep.subr.bf16.mxu0 0
    %974 = vmatpush1.bf16.msra.mxu0 %v750
    %975 = vmatprep.subr.bf16.mxu0 0
    %976 = vmatpush1.bf16.msra.mxu0 %v753
    %977 = vmatprep.subr.bf16.mxu0 0
    %978 = vmatpush1.bf16.msra.mxu0 %v756
    %979 = vmatprep.subr.bf16.mxu0 0
    %980 = vmatpush1.bf16.msra.mxu0 %v759
    %981 = vmatprep.subr.bf16.mxu0 0
    %982 = vmatpush1.bf16.msra.mxu0 %v762
    %983 = vmatprep.subr.bf16.mxu0 0
    %984 = vmatpush1.bf16.msra.mxu0 %v765
    %985 = vmatprep.subr.bf16.mxu0 0
    %986 = vmatpush1.bf16.msra.mxu0 %v768
    %987 = vmatprep.subr.bf16.mxu0 0
    %988 = vmatpush1.bf16.msra.mxu0 %v771
    %989 = vmatprep.subr.bf16.mxu0 0
    %990 = vmatpush1.bf16.msra.mxu0 %v774
    %991 = vmatprep.subr.bf16.mxu0 0
    %992 = vmatpush1.bf16.msra.mxu0 %v777
    %993 = vmatprep.subr.bf16.mxu0 0
    %994 = vmatpush1.bf16.msra.mxu0 %v780
    %995 = vmatprep.mubr.bf16.mxu0 %v378
    %996 = vmatmul.mubr.bf16.gmra.mrb[0].mxu0 %v377
    %v997 = vpop.f32.mrb[0].mxu0
    %v998 = vadd.f32 %v489, %v997
    %v999 = vpop.f32.mrb[0].mxu0
    %v1000 = vpop.f32.mrb[0].mxu0
    %v1001 = vadd.f32 %v489, %v1000
    %v1002 = vpop.f32.mrb[0].mxu0
    %1003 = vdwg.mxu0
    %1004 = vmatprep.subr.bf16.mxu0 0
    %1005 = vmatpush1.bf16.msra.mxu0 %v783
    %1006 = vmatprep.subr.bf16.mxu0 0
    %1007 = vmatpush1.bf16.msra.mxu0 %v786
    %1008 = vmatprep.subr.bf16.mxu0 0
    %1009 = vmatpush1.bf16.msra.mxu0 %v789
    %1010 = vmatprep.subr.bf16.mxu0 0
    %1011 = vmatpush1.bf16.msra.mxu0 %v792
    %1012 = vmatprep.subr.bf16.mxu0 0
    %1013 = vmatpush1.bf16.msra.mxu0 %v795
    %1014 = vmatprep.subr.bf16.mxu0 0
    %1015 = vmatpush1.bf16.msra.mxu0 %v798
    %1016 = vmatprep.subr.bf16.mxu0 0
    %1017 = vmatpush1.bf16.msra.mxu0 %v801
    %1018 = vmatprep.subr.bf16.mxu0 0
    %1019 = vmatpush1.bf16.msra.mxu0 %v804
    %1020 = vmatprep.subr.bf16.mxu0 0
    %1021 = vmatpush1.bf16.msra.mxu0 0
    %1022 = vmatprep.subr.bf16.mxu0 0
    %1023 = vmatpush1.bf16.msra.mxu0 0
    %1024 = vmatprep.subr.bf16.mxu0 0
    %1025 = vmatpush1.bf16.msra.mxu0 0
    %1026 = vmatprep.subr.bf16.mxu0 0
    %1027 = vmatpush1.bf16.msra.mxu0 0
    %1028 = vmatprep.subr.bf16.mxu0 0
    %1029 = vmatpush1.bf16.msra.mxu0 0
    %1030 = vmatprep.subr.bf16.mxu0 0
    %1031 = vmatpush1.bf16.msra.mxu0 0
    %1032 = vmatprep.subr.bf16.mxu0 0
    %1033 = vmatpush1.bf16.msra.mxu0 0
    %1034 = vmatprep.subr.bf16.mxu0 0
    %1035 = vmatpush1.bf16.msra.mxu0 0
    %1036 = vmatprep.mubr.bf16.mxu0 0
    %1037 = vmatmul.mubr.bf16.gmra.mrb[0].mxu0 %v379
    %v1038 = vpop.f32.mrb[0].mxu0
    %v1039 = vadd.f32 %v998, %v1038
    %v1040 = vpop.f32.mrb[0].mxu0
    %v1041 = vpop.f32.mrb[0].mxu0
    %v1042 = vadd.f32 %v1001, %v1041
    %v1043 = vpop.f32.mrb[0].mxu0
    %1044 = vdwg.mxu0
    %v1045 = vmax.f32 %v955, 0.0
    %v1046 = vmax.f32 %v957, 0.0
    %v1047 = vmax.f32 %v1039, 0.0
    %v1048 = vmax.f32 %v959, 0.0
    %v1049 = vmax.f32 %v961, 0.0
    %v1050 = vmax.f32 %v1042, 0.0
    %v1051 = vpack.c.bf16 %v1048, %v1045
    %v1052 = vpack.c.bf16 %v1049, %v1046
    %v1053 = vpack.c.bf16 %v1050, %v1047
    %v1054 = vld [vmem:[#allocation7] sm:$0xf]
    %v1055 = vld [vmem:[#allocation7 + $0x4] sm:$0xf]
    %v1056 = vld [vmem:[#allocation7 + $0x8] sm:$0xf]
    %v1057 = vld [vmem:[#allocation7 + $0xc] sm:$0xf]
    %v1058 = vld [vmem:[#allocation7 + $0x10] sm:$0xf]
    %v1059 = vld [vmem:[#allocation7 + $0x14] sm:$0xf]
    %v1060 = vld [vmem:[#allocation7 + $0x18] sm:$0xf]
    %v1061 = vld [vmem:[#allocation7 + $0x1c] sm:$0xf]
    %v1062 = vld [vmem:[#allocation7 + $0x20] sm:$0xf]
    %v1063 = vld [vmem:[#allocation7 + $0x24] sm:$0xf]
    %v1064 = vld [vmem:[#allocation7 + $0x28] sm:$0xf]
    %v1065 = vld [vmem:[#allocation7 + $0x2c] sm:$0xf]
    %v1066 = vld [vmem:[#allocation7 + $0x30] sm:$0xf]
    %v1067 = vld [vmem:[#allocation7 + $0x34] sm:$0xf]
    %v1068 = vld [vmem:[#allocation7 + $0x38] sm:$0xf]
    %v1069 = vld [vmem:[#allocation7 + $0x3c] sm:$0xf]
    %v1070 = vld [vmem:[#allocation7 + $0x40] sm:$0xf]
    %v1071 = vld [vmem:[#allocation7 + $0x44] sm:$0xf]
    %v1072 = vld [vmem:[#allocation7 + $0x48] sm:$0xf]
    %v1073 = vld [vmem:[#allocation7 + $0x4c] sm:$0xf]
    %v1074 = vld [vmem:[#allocation7 + $0x50] sm:$0xf]
    %v1075 = vld [vmem:[#allocation7 + $0x54] sm:$0xf]
    %v1076 = vld [vmem:[#allocation7 + $0x58] sm:$0xf]
    %v1077 = vld [vmem:[#allocation7 + $0x5c] sm:$0xf]
    %v1078 = vld [vmem:[#allocation7 + $0x60] sm:$0xf]
    %v1079 = vld [vmem:[#allocation7 + $0x64] sm:$0xf]
    %v1080 = vld [vmem:[#allocation7 + $0x68] sm:$0xf]
    %v1081 = vld [vmem:[#allocation7 + $0x6c] sm:$0xf]
    %v1082 = vld [vmem:[#allocation7 + $0x70] sm:$0xf]
    %v1083 = vld [vmem:[#allocation7 + $0x74] sm:$0xf]
    %v1084 = vld [vmem:[#allocation7 + $0x78] sm:$0xf]
    %v1085 = vld [vmem:[#allocation7 + $0x7c] sm:$0xf]
    %v1086 = vld [vmem:[#allocation7 + $0x80] sm:$0xf]
    %v1087 = vld [vmem:[#allocation7 + $0x84] sm:$0xf]
    %v1088 = vld [vmem:[#allocation7 + $0x88] sm:$0xf]
    %v1089 = vld [vmem:[#allocation7 + $0x8c] sm:$0xf]
    %v1090 = vld [vmem:[#allocation7 + $0x90] sm:$0xf]
    %v1091 = vld [vmem:[#allocation7 + $0x94] sm:$0xf]
    %v1092 = vld [vmem:[#allocation7 + $0x98] sm:$0xf]
    %v1093 = vld [vmem:[#allocation7 + $0x9c] sm:$0xf]
    %v1094 = vld [vmem:[#allocation7 + $0xa0] sm:$0xf]
    %v1095 = vld [vmem:[#allocation7 + $0xa4] sm:$0xf]
    %v1096 = vld [vmem:[#allocation7 + $0xa8] sm:$0xf]
    %v1097 = vld [vmem:[#allocation7 + $0xac] sm:$0xf]
    %v1098 = vld [vmem:[#allocation7 + $0xb0] sm:$0xf]
    %v1099 = vld [vmem:[#allocation7 + $0xb4] sm:$0xf]
    %v1100 = vld [vmem:[#allocation7 + $0xb8] sm:$0xf]
    %v1101 = vld [vmem:[#allocation7 + $0xbc] sm:$0xf]
    %v1102 = vld [vmem:[%s6] sm:$0x1]
    %v1104 = vlaneseq
    %v1105 = vshrl.u32 %v1104, 7
    %v1106 = vsub.s32 0, %v1105
    %v1107 = vrot.slane %v1102, %v1106
    %v1157 = vunpack.c.l.b16 %v1054
    %v1158 = vunpack.c.l.b16 %v1055
    %v1159 = vunpack.c.l.b16 %v1056
    %v1160 = vunpack.c.l.b16 %v1057
    %v1161 = vunpack.c.l.b16 %v1058
    %v1162 = vunpack.c.l.b16 %v1059
    %v1163 = vunpack.c.l.b16 %v1060
    %v1164 = vunpack.c.l.b16 %v1061
    %v1165 = vunpack.c.l.b16 %v1062
    %v1166 = vunpack.c.l.b16 %v1063
    %v1167 = vunpack.c.l.b16 %v1064
    %v1168 = vunpack.c.l.b16 %v1065
    %v1169 = vunpack.c.l.b16 %v1066
    %v1170 = vunpack.c.l.b16 %v1067
    %v1171 = vunpack.c.l.b16 %v1068
    %v1172 = vunpack.c.l.b16 %v1069
    %v1173 = vunpack.c.l.b16 %v1070
    %v1174 = vunpack.c.l.b16 %v1071
    %v1175 = vunpack.c.l.b16 %v1072
    %v1176 = vunpack.c.l.b16 %v1073
    %v1177 = vunpack.c.l.b16 %v1074
    %v1178 = vunpack.c.l.b16 %v1075
    %v1179 = vunpack.c.l.b16 %v1076
    %v1180 = vunpack.c.l.b16 %v1077
    %v1181 = vunpack.c.l.b16 %v1078
    %v1182 = vunpack.c.l.b16 %v1079
    %v1183 = vunpack.c.l.b16 %v1080
    %v1184 = vunpack.c.l.b16 %v1081
    %v1185 = vunpack.c.l.b16 %v1082
    %v1186 = vunpack.c.l.b16 %v1083
    %v1187 = vunpack.c.l.b16 %v1084
    %v1188 = vunpack.c.l.b16 %v1085
    %v1189 = vunpack.c.l.b16 %v1086
    %v1190 = vunpack.c.l.b16 %v1087
    %v1191 = vunpack.c.l.b16 %v1088
    %v1192 = vunpack.c.l.b16 %v1089
    %v1193 = vunpack.c.l.b16 %v1090
    %v1194 = vunpack.c.l.b16 %v1091
    %v1195 = vunpack.c.l.b16 %v1092
    %v1196 = vunpack.c.l.b16 %v1093
    %v1197 = vunpack.c.l.b16 %v1094
    %v1198 = vunpack.c.l.b16 %v1095
    %v1199 = vunpack.c.l.b16 %v1096
    %v1200 = vunpack.c.l.b16 %v1097
    %v1201 = vunpack.c.l.b16 %v1098
    %v1202 = vunpack.c.l.b16 %v1099
    %v1203 = vunpack.c.l.b16 %v1100
    %v1204 = vunpack.c.l.b16 %v1101
    %v1205 = vpack.c.b16 %v1158, %v1157
    %v1206 = vpack.c.b16 %v1160, %v1159
    %v1207 = vpack.c.b16 %v1162, %v1161
    %v1208 = vpack.c.b16 %v1164, %v1163
    %v1209 = vpack.c.b16 %v1166, %v1165
    %v1210 = vpack.c.b16 %v1168, %v1167
    %v1211 = vpack.c.b16 %v1170, %v1169
    %v1212 = vpack.c.b16 %v1172, %v1171
    %v1213 = vpack.c.b16 %v1174, %v1173
    %v1214 = vpack.c.b16 %v1176, %v1175
    %v1215 = vpack.c.b16 %v1178, %v1177
    %v1216 = vpack.c.b16 %v1180, %v1179
    %v1217 = vpack.c.b16 %v1182, %v1181
    %v1218 = vpack.c.b16 %v1184, %v1183
    %v1219 = vpack.c.b16 %v1186, %v1185
    %v1220 = vpack.c.b16 %v1188, %v1187
    %v1221 = vpack.c.b16 %v1190, %v1189
    %v1222 = vpack.c.b16 %v1192, %v1191
    %v1223 = vpack.c.b16 %v1194, %v1193
    %v1224 = vpack.c.b16 %v1196, %v1195
    %v1225 = vpack.c.b16 %v1198, %v1197
    %v1226 = vpack.c.b16 %v1200, %v1199
    %v1227 = vpack.c.b16 %v1202, %v1201
    %v1228 = vpack.c.b16 %v1204, %v1203
    %1253 = vmatprep.subr.bf16.mxu0 0
    %1254 = vmatpush1.bf16.msra.mxu0 %v1205
    %1255 = vmatprep.subr.bf16.mxu0 0
    %1256 = vmatpush1.bf16.msra.mxu0 %v1206
    %1257 = vmatprep.subr.bf16.mxu0 0
    %1258 = vmatpush1.bf16.msra.mxu0 %v1207
    %1259 = vmatprep.subr.bf16.mxu0 0
    %1260 = vmatpush1.bf16.msra.mxu0 %v1208
    %1261 = vmatprep.subr.bf16.mxu0 0
    %1262 = vmatpush1.bf16.msra.mxu0 %v1209
    %1263 = vmatprep.subr.bf16.mxu0 0
    %1264 = vmatpush1.bf16.msra.mxu0 %v1210
    %1265 = vmatprep.subr.bf16.mxu0 0
    %1266 = vmatpush1.bf16.msra.mxu0 %v1211
    %1267 = vmatprep.subr.bf16.mxu0 0
    %1268 = vmatpush1.bf16.msra.mxu0 %v1212
    %1269 = vmatprep.subr.bf16.mxu0 0
    %1270 = vmatpush1.bf16.msra.mxu0 %v1213
    %1271 = vmatprep.subr.bf16.mxu0 0
    %1272 = vmatpush1.bf16.msra.mxu0 %v1214
    %1273 = vmatprep.subr.bf16.mxu0 0
    %1274 = vmatpush1.bf16.msra.mxu0 %v1215
    %1275 = vmatprep.subr.bf16.mxu0 0
    %1276 = vmatpush1.bf16.msra.mxu0 %v1216
    %1277 = vmatprep.subr.bf16.mxu0 0
    %1278 = vmatpush1.bf16.msra.mxu0 %v1217
    %1279 = vmatprep.subr.bf16.mxu0 0
    %1280 = vmatpush1.bf16.msra.mxu0 %v1218
    %1281 = vmatprep.subr.bf16.mxu0 0
    %1282 = vmatpush1.bf16.msra.mxu0 %v1219
    %1283 = vmatprep.subr.bf16.mxu0 0
    %1284 = vmatpush1.bf16.msra.mxu0 %v1220
    %1285 = vmatprep.mubr.bf16.mxu0 %v1052
    %1286 = vmatmul.mubr.bf16.gmra.mrb[0].mxu0 %v1051
    %v1287 = vpop.f32.mrb[0].mxu0
    %v1288 = vadd.f32 %v1107, %v1287
    %v1289 = vpop.f32.mrb[0].mxu0
    %v1290 = vpop.f32.mrb[0].mxu0
    %v1291 = vadd.f32 %v1107, %v1290
    %v1292 = vpop.f32.mrb[0].mxu0
    %1293 = vdwg.mxu0
    %1294 = vmatprep.subr.bf16.mxu0 0
    %1295 = vmatpush1.bf16.msra.mxu0 %v1221
    %1296 = vmatprep.subr.bf16.mxu0 0
    %1297 = vmatpush1.bf16.msra.mxu0 %v1222
    %1298 = vmatprep.subr.bf16.mxu0 0
    %1299 = vmatpush1.bf16.msra.mxu0 %v1223
    %1300 = vmatprep.subr.bf16.mxu0 0
    %1301 = vmatpush1.bf16.msra.mxu0 %v1224
    %1302 = vmatprep.subr.bf16.mxu0 0
    %1303 = vmatpush1.bf16.msra.mxu0 %v1225
    %1304 = vmatprep.subr.bf16.mxu0 0
    %1305 = vmatpush1.bf16.msra.mxu0 %v1226
    %1306 = vmatprep.subr.bf16.mxu0 0
    %1307 = vmatpush1.bf16.msra.mxu0 %v1227
    %1308 = vmatprep.subr.bf16.mxu0 0
    %1309 = vmatpush1.bf16.msra.mxu0 %v1228
    %1310 = vmatprep.subr.bf16.mxu0 0
    %1311 = vmatpush1.bf16.msra.mxu0 0
    %1312 = vmatprep.subr.bf16.mxu0 0
    %1313 = vmatpush1.bf16.msra.mxu0 0
    %1314 = vmatprep.subr.bf16.mxu0 0
    %1315 = vmatpush1.bf16.msra.mxu0 0
    %1316 = vmatprep.subr.bf16.mxu0 0
    %1317 = vmatpush1.bf16.msra.mxu0 0
    %1318 = vmatprep.subr.bf16.mxu0 0
    %1319 = vmatpush1.bf16.msra.mxu0 0
    %1320 = vmatprep.subr.bf16.mxu0 0
    %1321 = vmatpush1.bf16.msra.mxu0 0
    %1322 = vmatprep.subr.bf16.mxu0 0
    %1323 = vmatpush1.bf16.msra.mxu0 0
    %1324 = vmatprep.subr.bf16.mxu0 0
    %1325 = vmatpush1.bf16.msra.mxu0 0
    %1326 = vmatprep.mubr.bf16.mxu0 0
    %1327 = vmatmul.mubr.bf16.gmra.mrb[0].mxu0 %v1053
    %v1328 = vpop.f32.mrb[0].mxu0
    %v1329 = vadd.f32 %v1288, %v1328
    %v1330 = vpop.f32.mrb[0].mxu0
    %v1331 = vpop.f32.mrb[0].mxu0
    %v1332 = vadd.f32 %v1291, %v1331
    %v1333 = vpop.f32.mrb[0].mxu0
    %1334 = vdwg.mxu0
    %1335 = vmax.xlane.f32.xlu0 %v1329
    %v1336 = vpop.xlane.xlu0 %1335
    %1337 = vmax.xlane.f32.xlu0 %v1332
    %v1338 = vpop.xlane.xlu0 %1337
    %v1339 = vsub.f32 %v1329, %v1336
    %v1340 = vsub.f32 %v1332, %v1338
    %v1341 = vmul.f32 %v1339, 1.442695
    %v1342 = vpow.pop %v1341
    %v1343 = vmul.f32 %v1340, 1.442695
    %v1344 = vpow.pop %v1343
    %1345 = vadd.xlane.f32.xlu0 %v1342
    %v1346 = vpop.xlane.xlu0 %1345
    %1347 = vadd.xlane.f32.xlu0 %v1344
    %v1348 = vpop.xlane.xlu0 %1347
    %v1349 = vrcp.pop %v1346
    %v1350 = vrcp.pop %v1348
    %v1351 = vmul.f32 %v1342, %v1349
    %v1352 = vmul.f32 %v1344, %v1350
    %v1353 = vpack.c.bf16 %v1352, %v1351
    %v1355 = vunpack.c.l.b16 %v1353
    %v1356 = vunpack.c.h.b16 %v1353
    %v1357 = vpack.c.b16 %v1355, %v1355
    %v1358 = vpack.c.b16 %v1356, %v1356
    %1361 = vst [vmem:[#allocation8] sm:$0xf] %v1357
    %1362 = vst [vmem:[#allocation8 + $0x4] sm:$0xf] %v1358
    // Predicated region
    $region42: #{tpu_custom_call.1} parent=1 // pred_check
      _
    $region43: #{tpu_custom_call.1} parent=1 // pred_check_branch
      %1364 = sbr.rel (0) target = $region45
    $region44: #{tpu_custom_call.1} parent=1 // pred_region
      %s1366 = ssub.s32 128, 128
      %1367 = vsyncadd [#allocation4], %s1366
      %s1368 = sshll.u32 [#allocation8], 4
      %s1369 = int_to_ptr.vmem [resolvable:$true] %s1368
      %1374 = dma.vmem_to_hbm [thread:$0]  %s1369, 128, %s7, [#allocation4], 64, 64, 4
    $region45: #{tpu_custom_call.1} parent=1 // pred_fallthru
      _
    // Predicated region
    $region46: #{tpu_custom_call.1} parent=1 // pred_check
      _
    $region47: #{tpu_custom_call.1} parent=1 // pred_check_branch
      %1376 = sbr.rel (0) target = $region49
    $region48: #{tpu_custom_call.1} parent=1 // pred_region
      %1377 = dma.done [#allocation4], 128
    $region49: #{tpu_custom_call.1} parent=1 // pred_fallthru
      _
    %1378 = vsyncpa [#allocation3], 1
    %1379 = vsyncpa [#allocation6], 1
    %1380 = vsyncpa [#allocation4], 1

</llo_original>
